<compile_context>
chip_gen: v7x
topology: tpu7x:2x2x1
jax: 0.10.0
libtpu: 0.0.40
codegen_flags: <defaults>
</compile_context>

<pallas_src>
import functools

import jax
import jax.numpy as jnp
from jax.experimental import pallas as pl
from jax.experimental.pallas import tpu as pltpu

PACK = 8                      # batch rows packed per lane-dense row
MIN_TILE = 128                # TB granularity -> TB/PACK is a multiple of 16
VMEM_BUDGET = 24 * 1024 * 1024  # cap on double-buffered working set (v7x-safe)
VMEM_LIMIT = 32 * 1024 * 1024   # explicit scoped-VMEM limit handed to Mosaic


def _discriminator_kernel(x_ref, z_ref, w0x_ref, w0z_ref, b0_ref,
                          w1_ref, b1_ref, out_ref, h_ref, *, apply_sigmoid):
    """Fused 2-layer MLP on one packed batch tile.

    x_ref  : (TB/8, 8*Fx)  packed x tile (8 batch rows per row)
    z_ref  : (TB/8, 8*Fz)  packed z tile
    w0x_ref: (8*Fx, 8*H)   block-diagonal first-layer weight (x half, resident)
    w0z_ref: (8*Fz, 8*H)   block-diagonal first-layer weight (z half, resident)
    b0_ref : (1, 8*H)      tiled first-layer bias
    w1_ref : (8*H, 8*O)    block-diagonal output-layer weight (resident)
    b1_ref : (1, 8*O)      tiled output-layer bias
    out_ref: (TB/8, 8*O)   packed logits / probabilities (f32)
    h_ref  : (TB/8, 8*H)   packed hidden activations (f32 or bf16)
    """
    x = x_ref[...].astype(jnp.float32)
    z = z_ref[...].astype(jnp.float32)

    # h = relu(cat(x, z) @ W0 + b0)  ==  relu(x @ W0x + z @ W0z + b0)
    pre_h = jnp.dot(x, w0x_ref[...], preferred_element_type=jnp.float32)
    pre_h = pre_h + jnp.dot(z, w0z_ref[...], preferred_element_type=jnp.float32)
    pre_h = pre_h + b0_ref[...]
    h = jnp.maximum(pre_h, 0.0)
    h_ref[...] = h.astype(h_ref.dtype)          # cast only at the store

    # logits = h @ W1 + b1
    logits = jnp.dot(h, w1_ref[...], preferred_element_type=jnp.float32)
    logits = logits + b1_ref[...]
    out = jax.nn.sigmoid(logits) if apply_sigmoid else logits
    out_ref[...] = out.astype(out_ref.dtype)


def _round_up(n, m):
    return ((n + m - 1) // m) * m


def _block_diag(w, pack):
    """(K, N) -> (pack*K, pack*N) block-diagonal replication of w."""
    k, n = w.shape
    eye = jnp.eye(pack, dtype=w.dtype)
    return jnp.einsum("pq,kn->pkqn", eye, w).reshape(pack * k, pack * n)


def discriminator_mlp_forward(x, z, params, activation=True, tile_b=8192,
                              h_dtype=jnp.bfloat16):
    """Pallas implementation of DiscriminatorMLP.forward.

    x: (B, Fx), z: (B, Fz)
    params: {"W0": (Fx+Fz, H), "b0": (1, H), "W1": (H, 2), "b1": (1, 2)}
            (weights stored [in, out], i.e. transposed vs. nn.Linear.weight)
    Returns (output (B, 2) float32, h (B, H) h_dtype).
    """
    B = x.shape[0]
    assert z.shape[0] == B, "x and z must share the batch dimension"
    Fx, Fz = x.shape[1], z.shape[1]
    F = Fx + Fz
    H = params["W0"].shape[1]
    O = params["W1"].shape[1]  # = 2

    # Guard: the block-diagonal expansion is a 64x weight-memory / 8x MXU-flop
    # multiplier; only use it while the packed weights stay tiny and the
    # kernel stays memory-bound.
    if 4 * PACK * PACK * F * H > (2 << 20):
        # TODO(synk): add an unpacked (TB, F) x (F, H) fallback path for wide MLPs.
        raise ValueError("Packed block-diagonal weights exceed 2 MiB; this "
                         "layout is only intended for tiny discriminator MLPs.")

    x_isz = jnp.dtype(x.dtype).itemsize
    z_isz = jnp.dtype(z.dtype).itemsize
    h_isz = jnp.dtype(h_dtype).itemsize

    # --- batch tile selection ----------------------------------------------
    tile_b = max(MIN_TILE, _round_up(int(tile_b), MIN_TILE))
    B_pad = _round_up(B, MIN_TILE)
    if B_pad >= 2 * MIN_TILE:
        # >= 2 grid steps whenever possible so the "parallel" axis actually
        # shards across v7x's 2 TensorCores (serial, harmless on v5e/v6e).
        TB = min(tile_b, _round_up(pl.cdiv(B_pad, 2), MIN_TILE))
    else:
        TB = B_pad

    # Clamp TB so double-buffered inputs + outputs (+ resident weights) fit the
    # VMEM budget on every generation.
    per_row = 2 * (Fx * x_isz + Fz * z_isz + H * h_isz + O * 4)
    w_bytes = 2 * 4 * (PACK * Fx * PACK * H + PACK * Fz * PACK * H
                       + PACK * H * PACK * O + PACK * (H + O))
    max_tb = max(MIN_TILE,
                 ((VMEM_BUDGET - w_bytes) // per_row) // MIN_TILE * MIN_TILE)
    TB = min(TB, max_tb)

    Bp = _round_up(B, TB)
    if Bp != B:
        pad = ((0, Bp - B), (0, 0))
        x = jnp.pad(x, pad)
        z = jnp.pad(z, pad)

    # --- layout plumbing (free reshapes on contiguous arrays) ----------------
    xp = x.reshape(Bp // PACK, PACK * Fx)
    zp = z.reshape(Bp // PACK, PACK * Fz)

    # NOTE: in a training loop, pack the weights once and reuse across steps.
    W0 = params["W0"]
    W0x = _block_diag(W0[:Fx], PACK)               # (8Fx, 8H)
    W0z = _block_diag(W0[Fx:], PACK)               # (8Fz, 8H)
    W1p = _block_diag(params["W1"], PACK)          # (8H, 8O)
    b0p = jnp.tile(params["b0"], (1, PACK))        # (1, 8H)
    b1p = jnp.tile(params["b1"], (1, PACK))        # (1, 8O)

    grid = (Bp // TB,)
    data_map = lambda i: (i, 0)        # batch-tiled operands
    const_map = lambda i: (0, 0)       # VMEM-resident weights / biases

    out_shapes = (
        jax.ShapeDtypeStruct((Bp // PACK, PACK * O), jnp.float32),
        jax.ShapeDtypeStruct((Bp // PACK, PACK * H), h_dtype),
    )

    kernel = functools.partial(_discriminator_kernel,
                               apply_sigmoid=bool(activation))

    cost = pl.CostEstimate(
        # Real MXU work: block-diagonal expansion is 8x the logical flops.
        flops=2 * Bp * PACK * (F * H + H * O),
        transcendentals=(Bp * O) if activation else 0,
        bytes_accessed=(Bp * (Fx * x_isz + Fz * z_isz + H * h_isz + O * 4)
                        + 4 * (PACK * F * PACK * H
                               + PACK * H * PACK * O
                               + PACK * (H + O))),
    )

    out_p, h_p = pl.pallas_call(
        kernel,
        out_shape=out_shapes,
        grid=grid,
        in_specs=[
            pl.BlockSpec((TB // PACK, PACK * Fx), data_map),   # packed x
            pl.BlockSpec((TB // PACK, PACK * Fz), data_map),   # packed z
            pl.BlockSpec((PACK * Fx, PACK * H), const_map),    # W0x (resident)
            pl.BlockSpec((PACK * Fz, PACK * H), const_map),    # W0z (resident)
            pl.BlockSpec((1, PACK * H), const_map),            # b0
            pl.BlockSpec((PACK * H, PACK * O), const_map),     # W1 (resident)
            pl.BlockSpec((1, PACK * O), const_map),            # b1
        ],
        out_specs=(
            pl.BlockSpec((TB // PACK, PACK * O), data_map),    # packed out
            pl.BlockSpec((TB // PACK, PACK * H), data_map),    # packed h
        ),
        compiler_params=pltpu.CompilerParams(
            dimension_semantics=("parallel",),
            vmem_limit_bytes=VMEM_LIMIT),
        cost_estimate=cost,
    )(xp, zp, W0x, W0z, b0p, W1p, b1p)

    out = out_p.reshape(Bp, O)[:B]
    h = h_p.reshape(Bp, H)[:B]
    return out, h


def init_params(key, x_features, z_features, h_dim_size=16):
    """Deterministic parameter init (mimics nn.Linear uniform init ranges)."""
    k0, k1, k2, k3 = jax.random.split(key, 4)
    in0 = x_features + z_features
    bound0 = 1.0 / jnp.sqrt(in0)
    bound1 = 1.0 / jnp.sqrt(h_dim_size)
    return {
        "W0": jax.random.uniform(k0, (in0, h_dim_size), jnp.float32, -bound0, bound0),
        "b0": jax.random.uniform(k1, (1, h_dim_size), jnp.float32, -bound0, bound0),
        "W1": jax.random.uniform(k2, (h_dim_size, 2), jnp.float32, -bound1, bound1),
        "b1": jax.random.uniform(k3, (1, 2), jnp.float32, -bound1, bound1),
    }


def _reference(x, z, params, activation):
    X = jnp.concatenate([x, z], axis=-1)
    h = jax.nn.relu(X @ params["W0"] + params["b0"])
    logits = h @ params["W1"] + params["b1"]
    out = jax.nn.sigmoid(logits) if activation else logits
    return out, h


if __name__ == "__main__":
    x_features, z_features, h_dim = 12, 20, 16
    key = jax.random.PRNGKey(0)
    kx, kz, kp = jax.random.split(key, 3)
    params = init_params(kp, x_features, z_features, h_dim)

    # Multi-tile grid case (B=300 -> padded to 512, two 256-row tiles).
    # f32 hidden writeback here so the core math can be checked tightly.
    B = 300
    x = jax.random.normal(kx, (B, x_features), jnp.float32)
    z = jax.random.normal(kz, (B, z_features), jnp.float32)

    out, h = discriminator_mlp_forward(x, z, params, activation=True,
                                       h_dtype=jnp.float32)
    jax.block_until_ready((out, h))
    out_ref, h_ref = _reference(x, z, params, True)
    assert out.shape == (B, 2) and h.shape == (B, h_dim)
    assert jnp.allclose(h, h_ref, atol=1e-4), "hidden mismatch"
    assert jnp.allclose(out, out_ref, atol=1e-4), "output mismatch"

    # activation=False path (trace-time specialization; no sigmoid emitted).
    out_na, _ = discriminator_mlp_forward(x, z, params, activation=False,
                                          h_dtype=jnp.float32)
    jax.block_until_ready(out_na)
    out_ref_na, _ = _reference(x, z, params, False)
    assert jnp.allclose(out_na, out_ref_na, atol=1e-4), "no-activation mismatch"

    # Default bandwidth-optimized path (bf16 hidden writeback) on a ragged
    # batch (exercises padding + single-tile grid).
    Br = 100
    xr = jax.random.normal(kx, (Br, x_features), jnp.float32)
    zr = jax.random.normal(kz, (Br, z_features), jnp.float32)
    out_r, h_r = discriminator_mlp_forward(xr, zr, params, activation=True)
    jax.block_until_ready((out_r, h_r))
    out_ref_r, h_ref_r = _reference(xr, zr, params, True)
    assert out_r.shape == (Br, 2) and h_r.shape == (Br, h_dim)
    assert h_r.dtype == jnp.bfloat16
    assert jnp.allclose(out_r, out_ref_r, atol=1e-4), "ragged output mismatch"
    assert jnp.allclose(h_r.astype(jnp.float32), h_ref_r,
                        atol=5e-2, rtol=2e-2), "ragged hidden (bf16) mismatch"

    print("KERNEL_OK")
</pallas_src>

<mosaic_0001>
module attributes {stable_mosaic.version = 11 : i64} {
  func.func @_discriminator_kernel(%arg0: i32, %arg1: memref<32x96xf32, #tpu.memory_space<vmem>>, %arg2: memref<32x160xf32, #tpu.memory_space<vmem>>, %arg3: memref<96x128xf32, #tpu.memory_space<vmem>>, %arg4: memref<160x128xf32, #tpu.memory_space<vmem>>, %arg5: memref<1x128xf32, #tpu.memory_space<vmem>>, %arg6: memref<128x16xf32, #tpu.memory_space<vmem>>, %arg7: memref<1x16xf32, #tpu.memory_space<vmem>>, %arg8: memref<32x16xf32, #tpu.memory_space<vmem>>, %arg9: memref<32x128xf32, #tpu.memory_space<vmem>>) attributes {dimension_semantics = [#tpu.dimension_semantics<parallel>], iteration_bounds = array<i64: 2>, scalar_prefetch = 0 : i64, scratch_operands = 0 : i64, tpu.core_type = #tpu.core_type<tc>, window_params = [{transform_indices = @transform_0, window_bounds = array<i64: 32, 96>}, {transform_indices = @transform_1, window_bounds = array<i64: 32, 160>}, {pipeline_mode = #tpu.pipeline_mode<synchronous>, transform_indices = @transform_2, window_bounds = array<i64: 96, 128>}, {pipeline_mode = #tpu.pipeline_mode<synchronous>, transform_indices = @transform_3, window_bounds = array<i64: 160, 128>}, {pipeline_mode = #tpu.pipeline_mode<synchronous>, transform_indices = @transform_4, window_bounds = array<i64: 1, 128>}, {pipeline_mode = #tpu.pipeline_mode<synchronous>, transform_indices = @transform_5, window_bounds = array<i64: 128, 16>}, {pipeline_mode = #tpu.pipeline_mode<synchronous>, transform_indices = @transform_6, window_bounds = array<i64: 1, 16>}, {transform_indices = @transform_7, window_bounds = array<i64: 32, 16>}, {transform_indices = @transform_8, window_bounds = array<i64: 32, 128>}]} {
    %c0 = arith.constant 0 : index
    %c0_0 = arith.constant 0 : index
    %0 = vector.load %arg1[%c0, %c0_0] : memref<32x96xf32, #tpu.memory_space<vmem>>, vector<32x96xf32>
    %c0_1 = arith.constant 0 : index
    %c0_2 = arith.constant 0 : index
    %1 = vector.load %arg2[%c0_1, %c0_2] : memref<32x160xf32, #tpu.memory_space<vmem>>, vector<32x160xf32>
    %c0_3 = arith.constant 0 : index
    %c0_4 = arith.constant 0 : index
    %2 = vector.load %arg3[%c0_3, %c0_4] : memref<96x128xf32, #tpu.memory_space<vmem>>, vector<96x128xf32>
    %cst = arith.constant dense<0.000000e+00> : vector<32x128xf32>
    %3 = tpu.matmul %0, %2, %cst {dimension_numbers = #tpu.dot_dimension_numbers<[1], [0], [0], [1], [0, 0, 1, 1], [], []>} : vector<32x96xf32>, vector<96x128xf32>, vector<32x128xf32> -> vector<32x128xf32>
    %c0_5 = arith.constant 0 : index
    %c0_6 = arith.constant 0 : index
    %4 = vector.load %arg4[%c0_5, %c0_6] : memref<160x128xf32, #tpu.memory_space<vmem>>, vector<160x128xf32>
    %cst_7 = arith.constant dense<0.000000e+00> : vector<32x128xf32>
    %5 = tpu.matmul %1, %4, %cst_7 {dimension_numbers = #tpu.dot_dimension_numbers<[1], [0], [0], [1], [0, 0, 1, 1], [], []>} : vector<32x160xf32>, vector<160x128xf32>, vector<32x128xf32> -> vector<32x128xf32>
    %6 = arith.addf %3, %5 : vector<32x128xf32>
    %c0_8 = arith.constant 0 : index
    %c0_9 = arith.constant 0 : index
    %7 = vector.load %arg5[%c0_8, %c0_9] : memref<1x128xf32, #tpu.memory_space<vmem>>, vector<1x128xf32>
    %8 = vector.broadcast %7 : vector<1x128xf32> to vector<32x128xf32>
    %9 = arith.addf %6, %8 : vector<32x128xf32>
    %cst_10 = arith.constant 0.000000e+00 : f32
    %10 = vector.broadcast %cst_10 : f32 to vector<32x128xf32>
    %11 = arith.maximumf %9, %10 : vector<32x128xf32>
    %c0_11 = arith.constant 0 : index
    %c0_12 = arith.constant 0 : index
    %12 = vector.load %arg9[%c0_11, %c0_12] : memref<32x128xf32, #tpu.memory_space<vmem>>, vector<32x128xf32>
    tpu.vector_store %arg9[%c0_11, %c0_12], %11 {strides = array<i32>} : memref<32x128xf32, #tpu.memory_space<vmem>>, vector<32x128xf32>,
    %c0_13 = arith.constant 0 : index
    %c0_14 = arith.constant 0 : index
    %13 = vector.load %arg6[%c0_13, %c0_14] : memref<128x16xf32, #tpu.memory_space<vmem>>, vector<128x16xf32>
    %cst_15 = arith.constant dense<0.000000e+00> : vector<32x16xf32>
    %14 = tpu.matmul %11, %13, %cst_15 {dimension_numbers = #tpu.dot_dimension_numbers<[1], [0], [0], [1], [0, 0, 1, 1], [], []>} : vector<32x128xf32>, vector<128x16xf32>, vector<32x16xf32> -> vector<32x16xf32>
    %c0_16 = arith.constant 0 : index
    %c0_17 = arith.constant 0 : index
    %15 = vector.load %arg7[%c0_16, %c0_17] : memref<1x16xf32, #tpu.memory_space<vmem>>, vector<1x16xf32>
    %16 = vector.broadcast %15 : vector<1x16xf32> to vector<32x16xf32>
    %17 = arith.addf %14, %16 : vector<32x16xf32>
    %18 = arith.negf %17 : vector<32x16xf32>
    %19 = math.exp %18 : vector<32x16xf32>
    %cst_18 = arith.constant 1.000000e+00 : f32
    %20 = vector.broadcast %cst_18 : f32 to vector<32x16xf32>
    %21 = arith.addf %20, %19 : vector<32x16xf32>
    %22 = arith.divf %20, %21 : vector<32x16xf32>
    %c0_19 = arith.constant 0 : index
    %c0_20 = arith.constant 0 : index
    %23 = vector.load %arg8[%c0_19, %c0_20] : memref<32x16xf32, #tpu.memory_space<vmem>>, vector<32x16xf32>
    tpu.vector_store %arg8[%c0_19, %c0_20], %22 {strides = array<i32>} : memref<32x16xf32, #tpu.memory_space<vmem>>, vector<32x16xf32>,
    return
  }
  func.func @transform_0(%arg0: i32) -> (i32, i32) {
    %c0_i32 = arith.constant 0 : i32
    %c0_i32_0 = arith.constant 0 : i32
    return %arg0, %c0_i32 : i32, i32
  }
  func.func @transform_1(%arg0: i32) -> (i32, i32) {
    %c0_i32 = arith.constant 0 : i32
    %c0_i32_0 = arith.constant 0 : i32
    return %arg0, %c0_i32 : i32, i32
  }
  func.func @transform_2(%arg0: i32) -> (i32, i32) {
    %c0_i32 = arith.constant 0 : i32
    %c0_i32_0 = arith.constant 0 : i32
    %c0_i32_1 = arith.constant 0 : i32
    return %c0_i32, %c0_i32_0 : i32, i32
  }
  func.func @transform_3(%arg0: i32) -> (i32, i32) {
    %c0_i32 = arith.constant 0 : i32
    %c0_i32_0 = arith.constant 0 : i32
    %c0_i32_1 = arith.constant 0 : i32
    return %c0_i32, %c0_i32_0 : i32, i32
  }
  func.func @transform_4(%arg0: i32) -> (i32, i32) {
    %c0_i32 = arith.constant 0 : i32
    %c0_i32_0 = arith.constant 0 : i32
    %c0_i32_1 = arith.constant 0 : i32
    return %c0_i32, %c0_i32_0 : i32, i32
  }
  func.func @transform_5(%arg0: i32) -> (i32, i32) {
    %c0_i32 = arith.constant 0 : i32
    %c0_i32_0 = arith.constant 0 : i32
    %c0_i32_1 = arith.constant 0 : i32
    return %c0_i32, %c0_i32_0 : i32, i32
  }
  func.func @transform_6(%arg0: i32) -> (i32, i32) {
    %c0_i32 = arith.constant 0 : i32
    %c0_i32_0 = arith.constant 0 : i32
    %c0_i32_1 = arith.constant 0 : i32
    return %c0_i32, %c0_i32_0 : i32, i32
  }
  func.func @transform_7(%arg0: i32) -> (i32, i32) {
    %c0_i32 = arith.constant 0 : i32
    %c0_i32_0 = arith.constant 0 : i32
    return %arg0, %c0_i32 : i32, i32
  }
  func.func @transform_8(%arg0: i32) -> (i32, i32) {
    %c0_i32 = arith.constant 0 : i32
    %c0_i32_0 = arith.constant 0 : i32
    return %arg0, %c0_i32 : i32, i32
  }
}

</mosaic_0001>

<llo_original>
// kernel: tpu_custom_call.1
$region0: #{tpu_custom_call.1}
  #allocation0 [shape = 'u32[]', space=smem, size = 0x4, offset = 0x4, fixed_abs, tag = 'smem constant byte address 0x4 - core index']
  #allocation1 [shape = 'u32[144,128]{1,0:T(1,128)}', space=vmem, size = 0x12000, scoped, tag = 'internal scratch']
  %s0 = inlined_call_operand.hbm [shape: f32[64,96], index: 0, kind: input, shape index: {}]
  %s1 = inlined_call_operand.vmem [shape: f32[64,160], index: 1, kind: input, shape index: {}]
  %s2 = inlined_call_operand.hbm [shape: f32[96,128], index: 2, kind: input, shape index: {}]
  %s3 = inlined_call_operand.hbm [shape: f32[160,128], index: 3, kind: input, shape index: {}]
  %s4 = inlined_call_operand.vmem [shape: f32[1,128], index: 4, kind: input, shape index: {}]
  %s5 = inlined_call_operand.vmem [shape: f32[128,16], index: 5, kind: input, shape index: {}]
  %s6 = inlined_call_operand.vmem [shape: f32[1,16], index: 6, kind: input, shape index: {}]
  %s7 = inlined_call_operand.vmem [shape: f32[64,16], index: 7, kind: output, shape index: {0}]
  %s8 = inlined_call_operand.hbm [shape: f32[64,128], index: 8, kind: output, shape index: {1}]
  %9 = xla_tuple %s7, %s8
  %s10 = sld [smem:[#allocation0]]
  $region81: #{tpu_custom_call.1} parent=0
    _
  %s12 = ssub.s32 1, %s10
  %s13 = scalar_select 0, %s12, %s10
  $region1: #{tpu_custom_call.1} parent=0
    #allocation2 [shape = 'u8[32768]{0}', space=vmem, size = 0x8000, scoped, tag = 'input window, operand 0']
    #allocation3 [shape = 's32[2]{0}', space=sflag, size = 0x8, scoped, tag = 'scoped memory for tpu_custom_call.1']
    #allocation4 [shape = 's32[2]{0}', space=sflag, size = 0x8, scoped, tag = 'scoped memory for tpu_custom_call.1']
    #allocation5 [shape = 'u8[49152]{0}', space=vmem, size = 0xc000, scoped, tag = 'input window, operand 2, single buffered']
    #allocation6 [shape = 's32[1]{0}', space=sflag, size = 0x4, scoped, tag = 'scoped memory for tpu_custom_call.1']
    #allocation7 [shape = 'u8[81920]{0}', space=vmem, size = 0x14000, scoped, tag = 'input window, operand 3, single buffered']
    #allocation8 [shape = 'u8[32768]{0}', space=vmem, size = 0x8000, scoped, tag = 'output window, operand 1']
    %14 = vsyncpa [#allocation3], 0
    %s15 = scalar_lea.sflag [#allocation3], 1
    %16 = vsyncpa %s15, 0
    %17 = vsyncpa [#allocation6], 0
    %18 = vsyncpa [#allocation4], 0
    %s19 = scalar_lea.sflag [#allocation4], 1
    %20 = vsyncpa %s19, 0
    loop: start=0, step=1, limit=4
    $region2: #{tpu_custom_call.1} parent=1 // loop_pre_header
      _
    $region3: #{tpu_custom_call.1} parent=1 // loop_header
      %s22 = sphi 0, %s26
      %p23 = scmp.ge.s32.totalorder %s22, 4
      %s32 = sphi 0, %s34
      %s35 = sphi 0, %s32
      %s36 = sphi 0, %s35
      %s52 = sphi 0, %s36
      %s58 = sphi 0, %s60
      %s61 = sphi 0, %s58
      %s62 = sphi 0, %s61
      %s78 = sphi 0, %s62
      %s82 = sphi 0, %s82
      %s84 = sphi 0, %s82
      %s85 = sphi 0, %s84
      %s99 = sphi 0, %s85
      %s103 = sphi 0, %s103
      %s105 = sphi 0, %s103
      %s106 = sphi 0, %s105
      %s120 = sphi 0, %s106
      %s124 = sphi 0, %s124
      %s126 = sphi 0, %s124
      %s127 = sphi 0, %s126
      %s141 = sphi 0, %s127
      %s145 = sphi 0, %s145
      %s147 = sphi 0, %s145
      %s148 = sphi 0, %s147
      %s162 = sphi 0, %s148
      %s166 = sphi 0, %s166
      %s168 = sphi 0, %s166
      %s169 = sphi 0, %s168
      %s183 = sphi 0, %s169
      %s189 = sphi 0, %s191
      %s192 = sphi 0, %s189
      %s193 = sphi 0, %s192
      %s209 = sphi 0, %s193
      %s215 = sphi 0, %s217
      %s218 = sphi 0, %s215
      %s219 = sphi 0, %s218
      %s235 = sphi 0, %s219
    $region4: #{tpu_custom_call.1} parent=1 // loop_header_branch
      %25 = sbr.rel (%p23) target = $region8
    $region5: #{tpu_custom_call.1} parent=1 // loop_body
      %s27 = ssub.s32 %s22, 1
      %s28 = ssub.s32 %s22, 2
      %s29 = sadd.s32 %s22, 1
      %s30 = ssub.s32 %s22, %s29
      %p31 = scmp.eq.s32.totalorder %s30, 0
      %s33 = sadd.s32 %s32, 1
      %s34 = scalar_select %p31, %s32, %s33
      %p37 = pneg %p31
      %p38 = scmp.eq.s32.totalorder %s22, 1
      %p39 = por %p37, %p38
      %p40 = scmp.ne.s32.totalorder %s32, %s35
      %p41 = scmp.eq.s32.totalorder %s22, 0
      %p42 = por %p40, %p41
      %p43 = scmp.ne.s32.totalorder %s32, %s35
      %p44 = scmp.eq.s32.totalorder %s27, 1
      %p45 = por %p43, %p44
      %p46 = scmp.ne.s32.totalorder %s35, %s36
      %p47 = scmp.eq.s32.totalorder %s27, 0
      %p48 = por %p46, %p47
      %p49 = scmp.ne.s32.totalorder %s35, %s36
      %p50 = scmp.eq.s32.totalorder %s28, 1
      %p51 = por %p49, %p50
      %p53 = scmp.ne.s32.totalorder %s36, %s52
      %p54 = scmp.eq.s32.totalorder %s28, 0
      %p55 = por %p53, %p54
      %s56 = ssub.s32 %s22, %s29
      %p57 = scmp.eq.s32.totalorder %s56, 0
      %s59 = sadd.s32 %s58, 1
      %s60 = scalar_select %p57, %s58, %s59
      %p63 = pneg %p57
      %p64 = scmp.eq.s32.totalorder %s22, 1
      %p65 = por %p63, %p64
      %p66 = scmp.ne.s32.totalorder %s58, %s61
      %p67 = scmp.eq.s32.totalorder %s22, 0
      %p68 = por %p66, %p67
      %p69 = scmp.ne.s32.totalorder %s58, %s61
      %p70 = scmp.eq.s32.totalorder %s27, 1
      %p71 = por %p69, %p70
      %p72 = scmp.ne.s32.totalorder %s61, %s62
      %p73 = scmp.eq.s32.totalorder %s27, 0
      %p74 = por %p72, %p73
      %p75 = scmp.ne.s32.totalorder %s61, %s62
      %p76 = scmp.eq.s32.totalorder %s28, 1
      %p77 = por %p75, %p76
      %p79 = scmp.ne.s32.totalorder %s62, %s78
      %p80 = scmp.eq.s32.totalorder %s28, 0
      %p81 = por %p79, %p80
      %s83 = sadd.s32 %s82, 1
      %p86 = scmp.eq.s32.totalorder %s22, 1
      %p87 = scmp.ne.s32.totalorder %s82, %s84
      %p88 = scmp.eq.s32.totalorder %s22, 0
      %p89 = por %p87, %p88
      %p90 = scmp.ne.s32.totalorder %s82, %s84
      %p91 = scmp.eq.s32.totalorder %s27, 1
      %p92 = por %p90, %p91
      %p93 = scmp.ne.s32.totalorder %s84, %s85
      %p94 = scmp.eq.s32.totalorder %s27, 0
      %p95 = por %p93, %p94
      %p96 = scmp.ne.s32.totalorder %s84, %s85
      %p97 = scmp.eq.s32.totalorder %s28, 1
      %p98 = por %p96, %p97
      %p100 = scmp.ne.s32.totalorder %s85, %s99
      %p101 = scmp.eq.s32.totalorder %s28, 0
      %p102 = por %p100, %p101
      %s104 = sadd.s32 %s103, 1
      %p107 = scmp.eq.s32.totalorder %s22, 1
      %p108 = scmp.ne.s32.totalorder %s103, %s105
      %p109 = scmp.eq.s32.totalorder %s22, 0
      %p110 = por %p108, %p109
      %p111 = scmp.ne.s32.totalorder %s103, %s105
      %p112 = scmp.eq.s32.totalorder %s27, 1
      %p113 = por %p111, %p112
      %p114 = scmp.ne.s32.totalorder %s105, %s106
      %p115 = scmp.eq.s32.totalorder %s27, 0
      %p116 = por %p114, %p115
      %p117 = scmp.ne.s32.totalorder %s105, %s106
      %p118 = scmp.eq.s32.totalorder %s28, 1
      %p119 = por %p117, %p118
      %p121 = scmp.ne.s32.totalorder %s106, %s120
      %p122 = scmp.eq.s32.totalorder %s28, 0
      %p123 = por %p121, %p122
      %s125 = sadd.s32 %s124, 1
      %p128 = scmp.eq.s32.totalorder %s22, 1
      %p129 = scmp.ne.s32.totalorder %s124, %s126
      %p130 = scmp.eq.s32.totalorder %s22, 0
      %p131 = por %p129, %p130
      %p132 = scmp.ne.s32.totalorder %s124, %s126
      %p133 = scmp.eq.s32.totalorder %s27, 1
      %p134 = por %p132, %p133
      %p135 = scmp.ne.s32.totalorder %s126, %s127
      %p136 = scmp.eq.s32.totalorder %s27, 0
      %p137 = por %p135, %p136
      %p138 = scmp.ne.s32.totalorder %s126, %s127
      %p139 = scmp.eq.s32.totalorder %s28, 1
      %p140 = por %p138, %p139
      %p142 = scmp.ne.s32.totalorder %s127, %s141
      %p143 = scmp.eq.s32.totalorder %s28, 0
      %p144 = por %p142, %p143
      %s146 = sadd.s32 %s145, 1
      %p149 = scmp.eq.s32.totalorder %s22, 1
      %p150 = scmp.ne.s32.totalorder %s145, %s147
      %p151 = scmp.eq.s32.totalorder %s22, 0
      %p152 = por %p150, %p151
      %p153 = scmp.ne.s32.totalorder %s145, %s147
      %p154 = scmp.eq.s32.totalorder %s27, 1
      %p155 = por %p153, %p154
      %p156 = scmp.ne.s32.totalorder %s147, %s148
      %p157 = scmp.eq.s32.totalorder %s27, 0
      %p158 = por %p156, %p157
      %p159 = scmp.ne.s32.totalorder %s147, %s148
      %p160 = scmp.eq.s32.totalorder %s28, 1
      %p161 = por %p159, %p160
      %p163 = scmp.ne.s32.totalorder %s148, %s162
      %p164 = scmp.eq.s32.totalorder %s28, 0
      %p165 = por %p163, %p164
      %s167 = sadd.s32 %s166, 1
      %p170 = scmp.eq.s32.totalorder %s22, 1
      %p171 = scmp.ne.s32.totalorder %s166, %s168
      %p172 = scmp.eq.s32.totalorder %s22, 0
      %p173 = por %p171, %p172
      %p174 = scmp.ne.s32.totalorder %s166, %s168
      %p175 = scmp.eq.s32.totalorder %s27, 1
      %p176 = por %p174, %p175
      %p177 = scmp.ne.s32.totalorder %s168, %s169
      %p178 = scmp.eq.s32.totalorder %s27, 0
      %p179 = por %p177, %p178
      %p180 = scmp.ne.s32.totalorder %s168, %s169
      %p181 = scmp.eq.s32.totalorder %s28, 1
      %p182 = por %p180, %p181
      %p184 = scmp.ne.s32.totalorder %s169, %s183
      %p185 = scmp.eq.s32.totalorder %s28, 0
      %p186 = por %p184, %p185
      %s187 = ssub.s32 %s22, %s29
      %p188 = scmp.eq.s32.totalorder %s187, 0
      %s190 = sadd.s32 %s189, 1
      %s191 = scalar_select %p188, %s189, %s190
      %p194 = pneg %p188
      %p195 = scmp.eq.s32.totalorder %s22, 1
      %p196 = por %p194, %p195
      %p197 = scmp.ne.s32.totalorder %s189, %s192
      %p198 = scmp.eq.s32.totalorder %s22, 0
      %p199 = por %p197, %p198
      %p200 = scmp.ne.s32.totalorder %s189, %s192
      %p201 = scmp.eq.s32.totalorder %s27, 1
      %p202 = por %p200, %p201
      %p203 = scmp.ne.s32.totalorder %s192, %s193
      %p204 = scmp.eq.s32.totalorder %s27, 0
      %p205 = por %p203, %p204
      %p206 = scmp.ne.s32.totalorder %s192, %s193
      %p207 = scmp.eq.s32.totalorder %s28, 1
      %p208 = por %p206, %p207
      %p210 = scmp.ne.s32.totalorder %s193, %s209
      %p211 = scmp.eq.s32.totalorder %s28, 0
      %p212 = por %p210, %p211
      %s213 = ssub.s32 %s22, %s29
      %p214 = scmp.eq.s32.totalorder %s213, 0
      %s216 = sadd.s32 %s215, 1
      %s217 = scalar_select %p214, %s215, %s216
      %p220 = pneg %p214
      %p221 = scmp.eq.s32.totalorder %s22, 1
      %p222 = por %p220, %p221
      %p223 = scmp.ne.s32.totalorder %s215, %s218
      %p224 = scmp.eq.s32.totalorder %s22, 0
      %p225 = por %p223, %p224
      %p226 = scmp.ne.s32.totalorder %s215, %s218
      %p227 = scmp.eq.s32.totalorder %s27, 1
      %p228 = por %p226, %p227
      %p229 = scmp.ne.s32.totalorder %s218, %s219
      %p230 = scmp.eq.s32.totalorder %s27, 0
      %p231 = por %p229, %p230
      %p232 = scmp.ne.s32.totalorder %s218, %s219
      %p233 = scmp.eq.s32.totalorder %s28, 1
      %p234 = por %p232, %p233
      %p236 = scmp.ne.s32.totalorder %s219, %s235
      %p237 = scmp.eq.s32.totalorder %s28, 0
      %p238 = por %p236, %p237
      %p239 = scmp.le.s32.totalorder 1, %s22
      %p240 = scmp.lt.s32.totalorder %s22, 3
      %p241 = pnand %p239, %p240
      %p242 = pneg %p241
      // Predicated region
      $region9: #{tpu_custom_call.1} parent=5 // pred_check
        _
      $region10: #{tpu_custom_call.1} parent=5 // pred_check_branch
        %244 = sbr.rel (%p241) target = $region12
      $region11: #{tpu_custom_call.1} parent=5 // pred_region
        %s245 = ssub.s32 %s22, 1
        // Predicated region
        $region13: #{tpu_custom_call.1} parent=11 // pred_check
          %p246 = pneg %p95
        $region14: #{tpu_custom_call.1} parent=11 // pred_check_branch
          %248 = sbr.rel (%p246) target = $region16
        $region15: #{tpu_custom_call.1} parent=11 // pred_region
          %s250 = ssub.s32 1536, 1536
          %251 = vsyncadd [#allocation6], %s250
          %s252 = sshll.u32 [#allocation5], 4
          %s253 = int_to_ptr.vmem [resolvable:$true] %s252
          %258 = dma.hbm_to_vmem [thread:$0]  %s2, 1536, %s253, [#allocation6], 128, 128, 8
        $region16: #{tpu_custom_call.1} parent=11 // pred_fallthru
          _
        // Predicated region
        $region17: #{tpu_custom_call.1} parent=11 // pred_check
          %p259 = pneg %p116
        $region18: #{tpu_custom_call.1} parent=11 // pred_check_branch
          %261 = sbr.rel (%p259) target = $region20
        $region19: #{tpu_custom_call.1} parent=11 // pred_region
          %s263 = ssub.s32 2560, 2560
          %264 = vsyncadd [#allocation6], %s263
          %s265 = sshll.u32 [#allocation7], 4
          %s266 = int_to_ptr.vmem [resolvable:$true] %s265
          %271 = dma.hbm_to_vmem [thread:$0]  %s3, 2560, %s266, [#allocation6], 128, 128, 8
        $region20: #{tpu_custom_call.1} parent=11 // pred_fallthru
          _
        // Predicated region
        $region21: #{tpu_custom_call.1} parent=11 // pred_check
          %p272 = pneg %p137
        $region22: #{tpu_custom_call.1} parent=11 // pred_check_branch
          %274 = sbr.rel (%p272) target = $region24
        $region23: #{tpu_custom_call.1} parent=11 // pred_region
          _
        $region24: #{tpu_custom_call.1} parent=11 // pred_fallthru
          _
        // Predicated region
        $region25: #{tpu_custom_call.1} parent=11 // pred_check
          %p275 = pneg %p158
        $region26: #{tpu_custom_call.1} parent=11 // pred_check_branch
          %277 = sbr.rel (%p275) target = $region28
        $region27: #{tpu_custom_call.1} parent=11 // pred_region
          _
        $region28: #{tpu_custom_call.1} parent=11 // pred_fallthru
          _
        // Predicated region
        $region29: #{tpu_custom_call.1} parent=11 // pred_check
          %p278 = pneg %p179
        $region30: #{tpu_custom_call.1} parent=11 // pred_check_branch
          %280 = sbr.rel (%p278) target = $region32
        $region31: #{tpu_custom_call.1} parent=11 // pred_region
          _
        $region32: #{tpu_custom_call.1} parent=11 // pred_fallthru
          _
      $region12: #{tpu_custom_call.1} parent=5 // pred_fallthru
        _
      %p281 = scmp.lt.s32.totalorder %s22, 2
      // Predicated region
      $region33: #{tpu_custom_call.1} parent=5 // pred_check
        %p282 = pneg %p281
      $region34: #{tpu_custom_call.1} parent=5 // pred_check_branch
        %284 = sbr.rel (%p282) target = $region36
      $region35: #{tpu_custom_call.1} parent=5 // pred_region
        // Predicated region
        $region37: #{tpu_custom_call.1} parent=35 // pred_check
          %p285 = pneg %p42
        $region38: #{tpu_custom_call.1} parent=35 // pred_check_branch
          %287 = sbr.rel (%p285) target = $region40
        $region39: #{tpu_custom_call.1} parent=35 // pred_region
          %s288 = sand.u32 %s32, 1
          %s289 = scalar_lea.sflag [#allocation3], %s288
          %s290 = sand.u32 %s32, 1
          %s291 = smul.addr %s290, 32
          %s292 = scalar_lea.vmem [#allocation2], %s291
          %s293 = smul.u32 4, %s22
          %s295 = ssub.s32 512, 512
          %296 = vsyncadd %s289, %s295
          %s297 = smul.addr %s293, 128
          %s298 = scalar_lea.hbm %s0, %s297
          %s299 = sshll.u32 %s292, 4
          %s300 = int_to_ptr.vmem [resolvable:$true] %s299
          %305 = dma.hbm_to_vmem [thread:$0]  %s298, 512, %s300, %s289, 128, 128, 8
        $region40: #{tpu_custom_call.1} parent=35 // pred_fallthru
          _
        // Predicated region
        $region41: #{tpu_custom_call.1} parent=35 // pred_check
          %p306 = pneg %p68
        $region42: #{tpu_custom_call.1} parent=35 // pred_check_branch
          %308 = sbr.rel (%p306) target = $region44
        $region43: #{tpu_custom_call.1} parent=35 // pred_region
          %s309 = smul.u32 4, %s22
          %p310 = scmp.lt.s32.totalorder %s309, 7
          %s311 = scalar_select %p310, %s309, 7
          %s312 = smul.addr %s311, 2
          %s313 = smul.addr %s312, 8
          %s314 = scalar_lea.vmem %s1, %s313
          %s315 = smul.u32 4, %s22
        $region44: #{tpu_custom_call.1} parent=35 // pred_fallthru
          _
      $region36: #{tpu_custom_call.1} parent=5 // pred_fallthru
        _
      %p316 = scmp.le.s32.totalorder 1, %s22
      %p317 = scmp.lt.s32.totalorder %s22, 3
      %p318 = pnand %p316, %p317
      %p319 = pneg %p318
      // Predicated region
      $region45: #{tpu_custom_call.1} parent=5 // pred_check
        _
      $region46: #{tpu_custom_call.1} parent=5 // pred_check_branch
        %321 = sbr.rel (%p318) target = $region48
      $region47: #{tpu_custom_call.1} parent=5 // pred_region
        %s322 = ssub.s32 %s22, 1
        %s323 = sand.u32 %s35, 1
        %s324 = scalar_lea.sflag [#allocation3], %s323
        %s325 = sand.u32 %s35, 1
        %s326 = smul.addr %s325, 32
        %s327 = scalar_lea.vmem [#allocation2], %s326
        // Predicated region
        $region49: #{tpu_custom_call.1} parent=47 // pred_check
          %p328 = pneg %p48
        $region50: #{tpu_custom_call.1} parent=47 // pred_check_branch
          %330 = sbr.rel (%p328) target = $region52
        $region51: #{tpu_custom_call.1} parent=47 // pred_region
          %331 = dma.done %s324, 512
        $region52: #{tpu_custom_call.1} parent=47 // pred_fallthru
          _
        // Predicated region
        $region53: #{tpu_custom_call.1} parent=47 // pred_check
          %p332 = pneg %p95
        $region54: #{tpu_custom_call.1} parent=47 // pred_check_branch
          %334 = sbr.rel (%p332) target = $region56
        $region55: #{tpu_custom_call.1} parent=47 // pred_region
          %335 = dma.done [#allocation6], 1536
        $region56: #{tpu_custom_call.1} parent=47 // pred_fallthru
          _
        // Predicated region
        $region57: #{tpu_custom_call.1} parent=47 // pred_check
          %p336 = pneg %p116
        $region58: #{tpu_custom_call.1} parent=47 // pred_check_branch
          %338 = sbr.rel (%p336) target = $region60
        $region59: #{tpu_custom_call.1} parent=47 // pred_region
          %339 = dma.done [#allocation6], 2560
        $region60: #{tpu_custom_call.1} parent=47 // pred_fallthru
          _
        %s340 = sand.u32 %s35, 1
        %s341 = scalar_lea.sflag [#allocation3], %s340
        %s342 = sand.u32 %s35, 1
        %s343 = smul.addr %s342, 32
        %s344 = scalar_lea.vmem [#allocation2], %s343
        %p345 = pneg %p48
        %p346 = pneg %p45
        %s347 = smul.u32 4, %s27
        %p348 = scmp.lt.s32.totalorder %s347, 7
        %s349 = scalar_select %p348, %s347, 7
        %s350 = smul.addr %s349, 2
        %s351 = smul.addr %s350, 8
        %s352 = scalar_lea.vmem %s1, %s351
        %p353 = pneg %p74
        %p354 = pneg %p71
        %p355 = pneg %p95
        %p356 = pneg %p92
        %p357 = pneg %p116
        %p358 = pneg %p113
        %p359 = pneg %p137
        %p360 = pneg %p134
        %p361 = pneg %p158
        %p362 = pneg %p155
        %p363 = pneg %p179
        %p364 = pneg %p176
        %p365 = pneg %p205
        %p366 = pneg %p202
        %s367 = smul.u32 4, %s27
        %p368 = scmp.lt.s32.totalorder %s367, 7
        %s369 = scalar_select %p368, %s367, 7
        %s370 = smul.addr %s369, 8
        %s371 = scalar_lea.vmem %s7, %s370
        %p372 = pneg %p231
        %p373 = pneg %p228
        %s374 = sand.u32 %s218, 1
        %s375 = scalar_lea.sflag [#allocation4], %s374
        %s376 = sand.u32 %s218, 1
        %s377 = smul.addr %s376, 32
        %s378 = scalar_lea.vmem [#allocation8], %s377
        %s379 = smul.u32 4, %s27
        %s380 = smul.u32 4, %s27
        %p381 = scmp.lt.s32.totalorder %s380, 7
        %s382 = scalar_select %p381, %s380, 7
        %s383 = smul.addr %s382, 2
        %s384 = smul.addr %s383, 8
        %s385 = scalar_lea.vmem %s1, %s384
        %s386 = smul.u32 4, %s27
        %s387 = smul.u32 4, %s27
        %p388 = scmp.lt.s32.totalorder %s387, 7
        %s389 = scalar_select %p388, %s387, 7
        %s390 = smul.addr %s389, 8
        %s391 = scalar_lea.vmem %s7, %s390
        %s392 = smul.u32 4, %s27
        %s393 = smul.u32 4, %s27
        %v394 = vld [vmem:[%s327] sm:$0xff]
        %v395 = vld [vmem:[%s327 + $0x8] sm:$0xff]
        %v396 = vld [vmem:[%s327 + $0x10] sm:$0xff]
        %v397 = vld [vmem:[%s327 + $0x18] sm:$0xff]
        %v398 = vld [vmem:[%s385] sm:$0xff]
        %v399 = vld [vmem:[%s385 + $0x8] sm:$0xff]
        %v400 = vld [vmem:[%s385 + $0x10] sm:$0xff]
        %v401 = vld [vmem:[%s385 + $0x18] sm:$0xff]
        %v402 = vld [vmem:[%s385 + $0x20] sm:$0xff]
        %v403 = vld [vmem:[%s385 + $0x28] sm:$0xff]
        %v404 = vld [vmem:[%s385 + $0x30] sm:$0xff]
        %v405 = vld [vmem:[%s385 + $0x38] sm:$0xff]
        %v406 = vld [vmem:[#allocation5] sm:$0xff]
        %v407 = vld [vmem:[#allocation5 + $0x8] sm:$0xff]
        %v408 = vld [vmem:[#allocation5 + $0x10] sm:$0xff]
        %v409 = vld [vmem:[#allocation5 + $0x18] sm:$0xff]
        %v410 = vld [vmem:[#allocation5 + $0x20] sm:$0xff]
        %v411 = vld [vmem:[#allocation5 + $0x28] sm:$0xff]
        %v412 = vld [vmem:[#allocation5 + $0x30] sm:$0xff]
        %v413 = vld [vmem:[#allocation5 + $0x38] sm:$0xff]
        %v414 = vld [vmem:[#allocation5 + $0x40] sm:$0xff]
        %v415 = vld [vmem:[#allocation5 + $0x48] sm:$0xff]
        %v416 = vld [vmem:[#allocation5 + $0x50] sm:$0xff]
        %v417 = vld [vmem:[#allocation5 + $0x58] sm:$0xff]
        %v418 = vld [vmem:[#allocation7] sm:$0xff]
        %v419 = vld [vmem:[#allocation7 + $0x8] sm:$0xff]
        %v420 = vld [vmem:[#allocation7 + $0x10] sm:$0xff]
        %v421 = vld [vmem:[#allocation7 + $0x18] sm:$0xff]
        %v422 = vld [vmem:[#allocation7 + $0x20] sm:$0xff]
        %v423 = vld [vmem:[#allocation7 + $0x28] sm:$0xff]
        %v424 = vld [vmem:[#allocation7 + $0x30] sm:$0xff]
        %v425 = vld [vmem:[#allocation7 + $0x38] sm:$0xff]
        %v426 = vld [vmem:[#allocation7 + $0x40] sm:$0xff]
        %v427 = vld [vmem:[#allocation7 + $0x48] sm:$0xff]
        %v428 = vld [vmem:[#allocation7 + $0x50] sm:$0xff]
        %v429 = vld [vmem:[#allocation7 + $0x58] sm:$0xff]
        %v430 = vld [vmem:[#allocation7 + $0x60] sm:$0xff]
        %v431 = vld [vmem:[#allocation7 + $0x68] sm:$0xff]
        %v432 = vld [vmem:[#allocation7 + $0x70] sm:$0xff]
        %v433 = vld [vmem:[#allocation7 + $0x78] sm:$0xff]
        %v434 = vld [vmem:[#allocation7 + $0x80] sm:$0xff]
        %v435 = vld [vmem:[#allocation7 + $0x88] sm:$0xff]
        %v436 = vld [vmem:[#allocation7 + $0x90] sm:$0xff]
        %v437 = vld [vmem:[#allocation7 + $0x98] sm:$0xff]
        %vm438 = vcmask 261120
        %v440 = vsel %vm438, %v399, 0
        %v443 = vsel %vm438, %v401, 0
        %v446 = vsel %vm438, %v403, 0
        %v449 = vsel %vm438, %v405, 0
        %451 = vmatprep.subr.mxu0 0.0
        %452 = vmatpush1.msra.mxu0 %v418
        %453 = vmatprep.subr.mxu0 0.0
        %454 = vmatpush1.msra.mxu0 %v419
        %455 = vmatprep.subr.mxu0 0.0
        %456 = vmatpush1.msra.mxu0 %v420
        %457 = vmatprep.subr.mxu0 0.0
        %458 = vmatpush1.msra.mxu0 %v421
        %459 = vmatprep.subr.mxu0 0.0
        %460 = vmatpush1.msra.mxu0 %v422
        %461 = vmatprep.subr.mxu0 0.0
        %462 = vmatpush1.msra.mxu0 %v423
        %463 = vmatprep.subr.mxu0 0.0
        %464 = vmatpush1.msra.mxu0 %v424
        %465 = vmatprep.subr.mxu0 0.0
        %466 = vmatpush1.msra.mxu0 %v425
        %467 = vmatprep.subr.mxu0 0.0
        %468 = vmatpush1.msra.mxu0 %v426
        %469 = vmatprep.subr.mxu0 0.0
        %470 = vmatpush1.msra.mxu0 %v427
        %471 = vmatprep.subr.mxu0 0.0
        %472 = vmatpush1.msra.mxu0 %v428
        %473 = vmatprep.subr.mxu0 0.0
        %474 = vmatpush1.msra.mxu0 %v429
        %475 = vmatprep.subr.mxu0 0.0
        %476 = vmatpush1.msra.mxu0 %v430
        %477 = vmatprep.subr.mxu0 0.0
        %478 = vmatpush1.msra.mxu0 %v431
        %479 = vmatprep.subr.mxu0 0.0
        %480 = vmatpush1.msra.mxu0 %v432
        %481 = vmatprep.subr.mxu0 0.0
        %482 = vmatpush1.msra.mxu0 %v433
        %483 = vmatprep.subr.mxu0 0.0
        %484 = vmatpush1.msra.mxu0 %v434
        %485 = vmatprep.subr.mxu0 0.0
        %486 = vmatpush1.msra.mxu0 %v435
        %487 = vmatprep.subr.mxu0 0.0
        %488 = vmatpush1.msra.mxu0 %v436
        %489 = vmatprep.subr.mxu0 0.0
        %490 = vmatpush1.msra.mxu0 %v437
        %491 = vmatprep.subr.mxu0 0.0
        %492 = vmatpush1.msra.mxu0 0.0
        %493 = vmatprep.subr.mxu0 0.0
        %494 = vmatpush1.msra.mxu0 0.0
        %495 = vmatprep.subr.mxu0 0.0
        %496 = vmatpush1.msra.mxu0 0.0
        %497 = vmatprep.subr.mxu0 0.0
        %498 = vmatpush1.msra.mxu0 0.0
        %499 = vmatprep.subr.mxu0 0.0
        %500 = vmatpush1.msra.mxu0 0.0
        %501 = vmatprep.subr.mxu0 0.0
        %502 = vmatpush1.msra.mxu0 0.0
        %503 = vmatprep.subr.mxu0 0.0
        %504 = vmatpush1.msra.mxu0 0.0
        %505 = vmatprep.subr.mxu0 0.0
        %506 = vmatpush1.msra.mxu0 0.0
        %507 = vmatprep.subr.mxu0 0.0
        %508 = vmatpush1.msra.mxu0 0.0
        %509 = vmatprep.subr.mxu0 0.0
        %510 = vmatpush1.msra.mxu0 0.0
        %511 = vmatprep.subr.mxu0 0.0
        %512 = vmatpush1.msra.mxu0 0.0
        %513 = vmatprep.subr.mxu0 0.0
        %514 = vmatpush1.msra.mxu0 0.0
        %515 = vmatprep.mubr.f32.mxu0 %v440
        %516 = vmatmul.mubr.f32.gmra.mrb[0].mxu0 %v398
        %v517 = vpop.f32.mrb[0].mxu0
        %v518 = vadd.f32 0.0, %v517
        %v519 = vpop.f32.mrb[0].mxu0
        %520 = vmatprep.mubr.f32.mxu0 %v443
        %521 = vmatmul.mubr.f32.gmra.mrb[0].mxu0 %v400
        %v522 = vpop.f32.mrb[0].mxu0
        %v523 = vadd.f32 0.0, %v522
        %v524 = vpop.f32.mrb[0].mxu0
        %525 = vmatprep.mubr.f32.mxu0 %v446
        %526 = vmatmul.mubr.f32.gmra.mrb[0].mxu0 %v402
        %v527 = vpop.f32.mrb[0].mxu0
        %v528 = vadd.f32 0.0, %v527
        %v529 = vpop.f32.mrb[0].mxu0
        %530 = vmatprep.mubr.f32.mxu0 %v449
        %531 = vmatmul.mubr.f32.gmra.mrb[0].mxu0 %v404
        %v532 = vpop.f32.mrb[0].mxu0
        %v533 = vadd.f32 0.0, %v532
        %v534 = vpop.f32.mrb[0].mxu0
        %535 = vdwg.mxu0
        %vm536 = vcmask 785408
        %v538 = vsel %vm536, %v394, 0
        %v541 = vsel %vm536, %v395, 0
        %v544 = vsel %vm536, %v396, 0
        %v547 = vsel %vm536, %v397, 0
        %549 = vmatprep.subr.mxu0 0.0
        %550 = vmatpush1.msra.mxu0 %v406
        %551 = vmatprep.subr.mxu0 0.0
        %552 = vmatpush1.msra.mxu0 %v407
        %553 = vmatprep.subr.mxu0 0.0
        %554 = vmatpush1.msra.mxu0 %v408
        %555 = vmatprep.subr.mxu0 0.0
        %556 = vmatpush1.msra.mxu0 %v409
        %557 = vmatprep.subr.mxu0 0.0
        %558 = vmatpush1.msra.mxu0 %v410
        %559 = vmatprep.subr.mxu0 0.0
        %560 = vmatpush1.msra.mxu0 %v411
        %561 = vmatprep.subr.mxu0 0.0
        %562 = vmatpush1.msra.mxu0 %v412
        %563 = vmatprep.subr.mxu0 0.0
        %564 = vmatpush1.msra.mxu0 %v413
        %565 = vmatprep.subr.mxu0 0.0
        %566 = vmatpush1.msra.mxu0 %v414
        %567 = vmatprep.subr.mxu0 0.0
        %568 = vmatpush1.msra.mxu0 %v415
        %569 = vmatprep.subr.mxu0 0.0
        %570 = vmatpush1.msra.mxu0 %v416
        %571 = vmatprep.subr.mxu0 0.0
        %572 = vmatpush1.msra.mxu0 %v417
        %573 = vmatprep.subr.mxu0 0.0
        %574 = vmatpush1.msra.mxu0 0.0
        %575 = vmatprep.subr.mxu0 0.0
        %576 = vmatpush1.msra.mxu0 0.0
        %577 = vmatprep.subr.mxu0 0.0
        %578 = vmatpush1.msra.mxu0 0.0
        %579 = vmatprep.subr.mxu0 0.0
        %580 = vmatpush1.msra.mxu0 0.0
        %581 = vmatprep.subr.mxu0 0.0
        %582 = vmatpush1.msra.mxu0 0.0
        %583 = vmatprep.subr.mxu0 0.0
        %584 = vmatpush1.msra.mxu0 0.0
        %585 = vmatprep.subr.mxu0 0.0
        %586 = vmatpush1.msra.mxu0 0.0
        %587 = vmatprep.subr.mxu0 0.0
        %588 = vmatpush1.msra.mxu0 0.0
        %589 = vmatprep.subr.mxu0 0.0
        %590 = vmatpush1.msra.mxu0 0.0
        %591 = vmatprep.subr.mxu0 0.0
        %592 = vmatpush1.msra.mxu0 0.0
        %593 = vmatprep.subr.mxu0 0.0
        %594 = vmatpush1.msra.mxu0 0.0
        %595 = vmatprep.subr.mxu0 0.0
        %596 = vmatpush1.msra.mxu0 0.0
        %597 = vmatprep.subr.mxu0 0.0
        %598 = vmatpush1.msra.mxu0 0.0
        %599 = vmatprep.subr.mxu0 0.0
        %600 = vmatpush1.msra.mxu0 0.0
        %601 = vmatprep.subr.mxu0 0.0
        %602 = vmatpush1.msra.mxu0 0.0
        %603 = vmatprep.subr.mxu0 0.0
        %604 = vmatpush1.msra.mxu0 0.0
        %605 = vmatprep.subr.mxu0 0.0
        %606 = vmatpush1.msra.mxu0 0.0
        %607 = vmatprep.subr.mxu0 0.0
        %608 = vmatpush1.msra.mxu0 0.0
        %609 = vmatprep.subr.mxu0 0.0
        %610 = vmatpush1.msra.mxu0 0.0
        %611 = vmatprep.subr.mxu0 0.0
        %612 = vmatpush1.msra.mxu0 0.0
        %613 = vmatprep.mubr.f32.mxu0 0.0
        %614 = vmatmul.mubr.f32.gmra.mrb[0].mxu0 %v538
        %v615 = vpop.f32.mrb[0].mxu0
        %v616 = vadd.f32 %v518, %v615
        %v617 = vpop.f32.mrb[0].mxu0
        %618 = vmatprep.mubr.f32.mxu0 0.0
        %619 = vmatmul.mubr.f32.gmra.mrb[0].mxu0 %v541
        %v620 = vpop.f32.mrb[0].mxu0
        %v621 = vadd.f32 %v523, %v620
        %v622 = vpop.f32.mrb[0].mxu0
        %623 = vmatprep.mubr.f32.mxu0 0.0
        %624 = vmatmul.mubr.f32.gmra.mrb[0].mxu0 %v544
        %v625 = vpop.f32.mrb[0].mxu0
        %v626 = vadd.f32 %v528, %v625
        %v627 = vpop.f32.mrb[0].mxu0
        %628 = vmatprep.mubr.f32.mxu0 0.0
        %629 = vmatmul.mubr.f32.gmra.mrb[0].mxu0 %v547
        %v630 = vpop.f32.mrb[0].mxu0
        %v631 = vadd.f32 %v533, %v630
        %v632 = vpop.f32.mrb[0].mxu0
        %633 = vdwg.mxu0
        %v634 = vld [vmem:[%s4] sm:$0x1]
        %v636 = vlaneseq
        %v637 = vshrl.u32 %v636, 7
        %v638 = vsub.s32 0, %v637
        %v639 = vrot.slane %v634, %v638
        %v641 = vadd.f32 %v616, %v639
        %v642 = vadd.f32 %v621, %v639
        %v643 = vadd.f32 %v626, %v639
        %v644 = vadd.f32 %v631, %v639
        %v645 = vmax.f32 %v641, 0.0
        %v646 = vmax.f32 %v642, 0.0
        %v647 = vmax.f32 %v643, 0.0
        %v648 = vmax.f32 %v644, 0.0
        %649 = vst [vmem:[%s378] sm:$0xff] %v645
        %650 = vst [vmem:[%s378 + $0x8] sm:$0xff] %v646
        %651 = vst [vmem:[%s378 + $0x10] sm:$0xff] %v647
        %652 = vst [vmem:[%s378 + $0x18] sm:$0xff] %v648
        %v653 = vld [vmem:[%s5] sm:$0xff]
        %v654 = vld [vmem:[%s5 + $0x8] sm:$0xff]
        %v655 = vld [vmem:[%s5 + $0x10] sm:$0xff]
        %v656 = vld [vmem:[%s5 + $0x18] sm:$0xff]
        %v657 = vld [vmem:[%s5 + $0x20] sm:$0xff]
        %v658 = vld [vmem:[%s5 + $0x28] sm:$0xff]
        %v659 = vld [vmem:[%s5 + $0x30] sm:$0xff]
        %v660 = vld [vmem:[%s5 + $0x38] sm:$0xff]
        %v661 = vld [vmem:[%s5 + $0x40] sm:$0xff]
        %v662 = vld [vmem:[%s5 + $0x48] sm:$0xff]
        %v663 = vld [vmem:[%s5 + $0x50] sm:$0xff]
        %v664 = vld [vmem:[%s5 + $0x58] sm:$0xff]
        %v665 = vld [vmem:[%s5 + $0x60] sm:$0xff]
        %v666 = vld [vmem:[%s5 + $0x68] sm:$0xff]
        %v667 = vld [vmem:[%s5 + $0x70] sm:$0xff]
        %v668 = vld [vmem:[%s5 + $0x78] sm:$0xff]
        %v669 = vld [vmem:[%s6] sm:$0x1]
        %v671 = vlaneseq
        %v672 = vshrl.u32 %v671, 7
        %v673 = vsub.s32 0, %v672
        %v674 = vrot.slane %v669, %v673
        %676 = vmatprep.subr.mxu0 0.0
        %677 = vmatpush1.msra.mxu0 %v653
        %678 = vmatprep.subr.mxu0 0.0
        %679 = vmatpush1.msra.mxu0 %v654
        %680 = vmatprep.subr.mxu0 0.0
        %681 = vmatpush1.msra.mxu0 %v655
        %682 = vmatprep.subr.mxu0 0.0
        %683 = vmatpush1.msra.mxu0 %v656
        %684 = vmatprep.subr.mxu0 0.0
        %685 = vmatpush1.msra.mxu0 %v657
        %686 = vmatprep.subr.mxu0 0.0
        %687 = vmatpush1.msra.mxu0 %v658
        %688 = vmatprep.subr.mxu0 0.0
        %689 = vmatpush1.msra.mxu0 %v659
        %690 = vmatprep.subr.mxu0 0.0
        %691 = vmatpush1.msra.mxu0 %v660
        %692 = vmatprep.subr.mxu0 0.0
        %693 = vmatpush1.msra.mxu0 %v661
        %694 = vmatprep.subr.mxu0 0.0
        %695 = vmatpush1.msra.mxu0 %v662
        %696 = vmatprep.subr.mxu0 0.0
        %697 = vmatpush1.msra.mxu0 %v663
        %698 = vmatprep.subr.mxu0 0.0
        %699 = vmatpush1.msra.mxu0 %v664
        %700 = vmatprep.subr.mxu0 0.0
        %701 = vmatpush1.msra.mxu0 %v665
        %702 = vmatprep.subr.mxu0 0.0
        %703 = vmatpush1.msra.mxu0 %v666
        %704 = vmatprep.subr.mxu0 0.0
        %705 = vmatpush1.msra.mxu0 %v667
        %706 = vmatprep.subr.mxu0 0.0
        %707 = vmatpush1.msra.mxu0 %v668
        %708 = vmatprep.subr.mxu0 0.0
        %709 = vmatpush1.msra.mxu0 0.0
        %710 = vmatprep.subr.mxu0 0.0
        %711 = vmatpush1.msra.mxu0 0.0
        %712 = vmatprep.subr.mxu0 0.0
        %713 = vmatpush1.msra.mxu0 0.0
        %714 = vmatprep.subr.mxu0 0.0
        %715 = vmatpush1.msra.mxu0 0.0
        %716 = vmatprep.subr.mxu0 0.0
        %717 = vmatpush1.msra.mxu0 0.0
        %718 = vmatprep.subr.mxu0 0.0
        %719 = vmatpush1.msra.mxu0 0.0
        %720 = vmatprep.subr.mxu0 0.0
        %721 = vmatpush1.msra.mxu0 0.0
        %722 = vmatprep.subr.mxu0 0.0
        %723 = vmatpush1.msra.mxu0 0.0
        %724 = vmatprep.subr.mxu0 0.0
        %725 = vmatpush1.msra.mxu0 0.0
        %726 = vmatprep.subr.mxu0 0.0
        %727 = vmatpush1.msra.mxu0 0.0
        %728 = vmatprep.subr.mxu0 0.0
        %729 = vmatpush1.msra.mxu0 0.0
        %730 = vmatprep.subr.mxu0 0.0
        %731 = vmatpush1.msra.mxu0 0.0
        %732 = vmatprep.subr.mxu0 0.0
        %733 = vmatpush1.msra.mxu0 0.0
        %734 = vmatprep.subr.mxu0 0.0
        %735 = vmatpush1.msra.mxu0 0.0
        %736 = vmatprep.subr.mxu0 0.0
        %737 = vmatpush1.msra.mxu0 0.0
        %738 = vmatprep.subr.mxu0 0.0
        %739 = vmatpush1.msra.mxu0 0.0
        %740 = vmatprep.mubr.f32.mxu0 0.0
        %741 = vmatmul.mubr.f32.gmra.mrb[0].mxu0 %v645
        %v742 = vpop.f32.mrb[0].mxu0
        %v743 = vadd.f32 %v674, %v742
        %v744 = vpop.f32.mrb[0].mxu0
        %745 = vmatprep.mubr.f32.mxu0 0.0
        %746 = vmatmul.mubr.f32.gmra.mrb[0].mxu0 %v646
        %v747 = vpop.f32.mrb[0].mxu0
        %v748 = vadd.f32 %v674, %v747
        %v749 = vpop.f32.mrb[0].mxu0
        %750 = vmatprep.mubr.f32.mxu0 0.0
        %751 = vmatmul.mubr.f32.gmra.mrb[0].mxu0 %v647
        %v752 = vpop.f32.mrb[0].mxu0
        %v753 = vadd.f32 %v674, %v752
        %v754 = vpop.f32.mrb[0].mxu0
        %755 = vmatprep.mubr.f32.mxu0 0.0
        %756 = vmatmul.mubr.f32.gmra.mrb[0].mxu0 %v648
        %v757 = vpop.f32.mrb[0].mxu0
        %v758 = vadd.f32 %v674, %v757
        %v759 = vpop.f32.mrb[0].mxu0
        %760 = vdwg.mxu0
        %v761 = vxor.u32 %v743, 2147483648
        %v762 = vxor.u32 %v748, 2147483648
        %v763 = vxor.u32 %v753, 2147483648
        %v764 = vxor.u32 %v758, 2147483648
        %v765 = vmul.f32 %v761, 1.442695
        %v766 = vpow.pop %v765
        %v767 = vmul.f32 %v762, 1.442695
        %v768 = vpow.pop %v767
        %v769 = vmul.f32 %v763, 1.442695
        %v770 = vpow.pop %v769
        %v771 = vmul.f32 %v764, 1.442695
        %v772 = vpow.pop %v771
        %v773 = vadd.f32 %v766, 1.0
        %v774 = vadd.f32 %v768, 1.0
        %v775 = vadd.f32 %v770, 1.0
        %v776 = vadd.f32 %v772, 1.0
        %v777 = vrcp.pop %v773
        %v778 = vmul.f32 1.0, %v777
        %v779 = vrcp.pop %v774
        %v780 = vmul.f32 1.0, %v779
        %v781 = vrcp.pop %v775
        %v782 = vmul.f32 1.0, %v781
        %v783 = vrcp.pop %v776
        %v784 = vmul.f32 1.0, %v783
        %vm785 = vcmask 130048
        %786 = vst.msk [vmem:[%s391] sm:$0xff] %vm785, %v778
        %787 = vst.msk [vmem:[%s391 + $0x8] sm:$0xff] %vm785, %v780
        %788 = vst.msk [vmem:[%s391 + $0x10] sm:$0xff] %vm785, %v782
        %789 = vst.msk [vmem:[%s391 + $0x18] sm:$0xff] %vm785, %v784
        %s790 = smul.u32 4, %s27
        %p791 = scmp.lt.s32.totalorder %s790, 7
        %s792 = scalar_select %p791, %s790, 7
        %s793 = smul.addr %s792, 8
        %s794 = scalar_lea.vmem %s7, %s793
        %s795 = sand.u32 %s218, 1
        %s796 = scalar_lea.sflag [#allocation4], %s795
        %s797 = sand.u32 %s218, 1
        %s798 = smul.addr %s797, 32
        %s799 = scalar_lea.vmem [#allocation8], %s798
        // Predicated region
        $region61: #{tpu_custom_call.1} parent=47 // pred_check
          %p800 = pneg %p202
        $region62: #{tpu_custom_call.1} parent=47 // pred_check_branch
          %802 = sbr.rel (%p800) target = $region64
        $region63: #{tpu_custom_call.1} parent=47 // pred_region
          %s803 = smul.u32 4, %s27
        $region64: #{tpu_custom_call.1} parent=47 // pred_fallthru
          _
        // Predicated region
        $region65: #{tpu_custom_call.1} parent=47 // pred_check
          %p804 = pneg %p228
        $region66: #{tpu_custom_call.1} parent=47 // pred_check_branch
          %806 = sbr.rel (%p804) target = $region68
        $region67: #{tpu_custom_call.1} parent=47 // pred_region
          %s807 = smul.u32 4, %s27
          %s809 = ssub.s32 512, 512
          %810 = vsyncadd %s796, %s809
          %s811 = smul.addr %s807, 128
          %s812 = scalar_lea.hbm %s8, %s811
          %s813 = sshll.u32 %s799, 4
          %s814 = int_to_ptr.vmem [resolvable:$true] %s813
          %819 = dma.vmem_to_hbm [thread:$0]  %s814, 512, %s812, %s796, 128, 128, 8
        $region68: #{tpu_custom_call.1} parent=47 // pred_fallthru
          _
      $region48: #{tpu_custom_call.1} parent=5 // pred_fallthru
        _
      %p820 = scmp.le.s32.totalorder 2, %s22
      // Predicated region
      $region69: #{tpu_custom_call.1} parent=5 // pred_check
        %p821 = pneg %p820
      $region70: #{tpu_custom_call.1} parent=5 // pred_check_branch
        %823 = sbr.rel (%p821) target = $region72
      $region71: #{tpu_custom_call.1} parent=5 // pred_region
        %s824 = ssub.s32 %s22, 2
        // Predicated region
        $region73: #{tpu_custom_call.1} parent=71 // pred_check
          %p825 = pneg %p208
        $region74: #{tpu_custom_call.1} parent=71 // pred_check_branch
          %827 = sbr.rel (%p825) target = $region76
        $region75: #{tpu_custom_call.1} parent=71 // pred_region
          %s828 = smul.u32 4, %s28
          %p829 = scmp.lt.s32.totalorder %s828, 7
          %s830 = scalar_select %p829, %s828, 7
          %s831 = smul.addr %s830, 8
          %s832 = scalar_lea.vmem %s7, %s831
        $region76: #{tpu_custom_call.1} parent=71 // pred_fallthru
          _
        // Predicated region
        $region77: #{tpu_custom_call.1} parent=71 // pred_check
          %p833 = pneg %p234
        $region78: #{tpu_custom_call.1} parent=71 // pred_check_branch
          %835 = sbr.rel (%p833) target = $region80
        $region79: #{tpu_custom_call.1} parent=71 // pred_region
          %s836 = sand.u32 %s219, 1
          %s837 = scalar_lea.sflag [#allocation4], %s836
          %s838 = sand.u32 %s219, 1
          %s839 = smul.addr %s838, 32
          %s840 = scalar_lea.vmem [#allocation8], %s839
          %841 = dma.done %s837, 512
        $region80: #{tpu_custom_call.1} parent=71 // pred_fallthru
          _
      $region72: #{tpu_custom_call.1} parent=5 // pred_fallthru
        _
    $region6: #{tpu_custom_call.1} parent=1 // loop_footer
      %s26 = sadd.s32 1, %s22
    $region7: #{tpu_custom_call.1} parent=1 // loop_footer_branch
      %21 = sbr.rel target = $region3
    $region8: #{tpu_custom_call.1} parent=1 // loop_exit
      _
    %842 = vsyncpa [#allocation3], 1
    %s843 = scalar_lea.sflag [#allocation3], 1
    %844 = vsyncpa %s843, 1
    %845 = vsyncpa [#allocation6], 1
    %846 = vsyncpa [#allocation4], 1
    %s847 = scalar_lea.sflag [#allocation4], 1
    %848 = vsyncpa %s847, 1

</llo_original>
